<compile_context>
chip_gen: v7x
topology: tpu7x:2x2x1
jax: 0.10.0
libtpu: 0.0.40
codegen_flags: <defaults>
</compile_context>

<pallas_src>
import functools

import jax
import jax.numpy as jnp
from jax import lax
from jax.experimental import pallas as pl
from jax.experimental.pallas import tpu as pltpu

_LANES = 128
# Large-negative finite mask value: avoids (-inf) - (-inf) = NaN in the
# lane-parallel online-LSE update for lane positions that only ever see
# padded (>= C) columns.
_NEG = -1e30


def _round_up(v: int, m: int) -> int:
    return ((v + m - 1) // m) * m


def _vmem_capacity_bytes() -> int:
    try:
        return int(pltpu.get_tpu_info().vmem_capacity_bytes)
    except Exception:
        pass
    try:
        kind = jax.devices()[0].device_kind.lower()
    except Exception:
        kind = ""
    if "v7" in kind or "7x" in kind:
        return 64 * 1024 * 1024
    return 128 * 1024 * 1024


def _use_bf16_exp() -> bool:
    # bf16 EUP exists on v6e/v7x; keep f32 exp on v5e and older (no bf16 EUP).
    try:
        kind = jax.devices()[0].device_kind.lower()
    except Exception:
        return False
    return not any(t in kind for t in ("v2", "v3", "v4", "v5"))


def _adm_softmax_kernel(scale: float, margin: float, n_classes: int,
                        c_pad: int, bf16_exp: bool):
    has_tail = (c_pad != n_classes)

    def kernel(x_ref, w_ref, lab_ref, logits_ref, lse_ref, m_ref, l_ref):
        j = pl.program_id(1)                     # C-tile index (reduction axis)

        @pl.when(j == 0)
        def _():
            m_ref[...] = jnp.full_like(m_ref, _NEG)
            l_ref[...] = jnp.zeros_like(l_ref)

        c_tile = logits_ref.shape[1]

        # cos_theta tile: (M, D) @ (C_TILE, D)^T via NT dot_general (no W
        # transpose); bf16 operands, f32 accumulation on the MXU.
        cos = lax.dot_general(
            x_ref[...], w_ref[...],
            dimension_numbers=(((1,), (1,)), ((), ())),
            preferred_element_type=jnp.float32)                    # (M, C_TILE)

        # Absolute class index of each column of this tile (2-D iota on TPU).
        col = j * c_tile + lax.broadcasted_iota(jnp.int32, cos.shape, 1)
        one_hot = col == lab_ref[...]                              # (M, 1) broadcast

        # logits = scale * where(one_hot, cos - margin, cos)
        logits = scale * jnp.where(one_hot, cos - margin, cos)
        logits_ref[...] = logits                                   # lane-dense store

        if has_tail:
            # Only needed when C % c_tile != 0 (padded tail columns).
            vals = jnp.where(col < n_classes, logits, _NEG)
        else:
            vals = logits

        def _exp(v):
            if bf16_exp:
                return jnp.exp(v.astype(jnp.bfloat16)).astype(jnp.float32)
            return jnp.exp(v)

        # Lane-parallel online logsumexp: each of the 128 lane positions is an
        # independent stream over columns {lane, lane+128, ...}.  Per-step work
        # is pure VPU max/add + EUP exp; the cross-lane combine happens once at
        # finalize.
        n_chunks = c_tile // _LANES
        m_prev = m_ref[...]
        m_new = m_prev
        for ci in range(n_chunks):
            m_new = jnp.maximum(m_new, vals[:, ci * _LANES:(ci + 1) * _LANES])
        s = jnp.zeros(l_ref.shape, l_ref.dtype)
        for ci in range(n_chunks):
            s = s + _exp(vals[:, ci * _LANES:(ci + 1) * _LANES] - m_new)
        l_ref[...] = _exp(m_prev - m_new) * l_ref[...] + s
        m_ref[...] = m_new

        # Finalize per-row logsumexp on the last C tile (single XLU reduce).
        @pl.when(j == pl.num_programs(1) - 1)
        def _():
            m_lane = m_ref[...]
            row_max = jnp.max(m_lane, axis=1, keepdims=True)       # (M, 1)
            l_row = jnp.sum(l_ref[...] * jnp.exp(m_lane - row_max),
                            axis=1, keepdims=True)
            lse_ref[...] = row_max + jnp.log(l_row)

    return kernel


@functools.partial(jax.jit, static_argnames=("scale", "margin"))
def adm_softmax_loss(x, weight, labels, *, scale=30.0, margin=0.4):
    """Returns (error, logits) matching AdMSoftmaxLoss.forward semantics."""
    n, d = x.shape
    c, d_w = weight.shape
    assert d == d_w
    assert labels.shape == (n,)

    # ---- Tile selection under a generation-aware VMEM budget ---------------
    budget = int(0.8 * _vmem_capacity_bytes())
    d_pad = _round_up(d, _LANES)

    # m_tile drives W reuse; keep >= 2 N-tiles when N allows (v7x megacore).
    m_tile = min(512, max(16, _round_up(-(-n // 2), 16)))
    c_tile = min(1024 if c >= 1024 else 512, _round_up(c, _LANES))

    def _est(m, ct):
        return (2 * m * d_pad * 2          # x bf16, double-buffered
                + 2 * ct * d_pad * 2       # W bf16, double-buffered
                + 2 * m * ct * 4           # logits f32, double-buffered
                + 6 * m * _LANES * 4)      # labels/lse blocks + m/l scratch

    while _est(m_tile, c_tile) > budget and c_tile > _LANES:
        c_tile = max(_LANES, _round_up(c_tile // 2, _LANES))
    while _est(m_tile, c_tile) > budget and m_tile > 16:
        m_tile = max(16, _round_up(m_tile // 2, 16))

    n_pad = _round_up(n, m_tile)
    c_pad = _round_up(c, c_tile)
    grid = (n_pad // m_tile, c_pad // c_tile)

    # ---- Input prep (wrapper-side; cheap vs. the streamed W traffic) -------
    # F.normalize(x, dim=1) with eps=1e-12, done once in f32, fed as bf16.
    x32 = x.astype(jnp.float32)
    inv = lax.rsqrt(jnp.maximum(jnp.sum(x32 * x32, axis=1, keepdims=True), 1e-24))
    x_p = jnp.pad((x32 * inv).astype(jnp.bfloat16), ((0, n_pad - n), (0, 0)))
    # TODO(synk): nn.Embedding(max_norm=1) renorm only triggers on lookup, which
    # never happens in this forward, so raw (un-normalized) weights are faithful.
    w_p = jnp.pad(weight.astype(jnp.bfloat16), ((0, c_pad - c), (0, 0)))
    lab_p = jnp.pad(labels.astype(jnp.int32), (0, n_pad - n)).reshape(n_pad, 1)

    logits_p, lse_rows = pl.pallas_call(
        _adm_softmax_kernel(float(scale), float(margin), c, c_pad, _use_bf16_exp()),
        out_shape=(
            jax.ShapeDtypeStruct((n_pad, c_pad), jnp.float32),   # logits
            jax.ShapeDtypeStruct((n_pad, 1), jnp.float32),       # per-row logsumexp
        ),
        grid=grid,
        in_specs=[
            pl.BlockSpec((m_tile, d), lambda i, j: (i, 0)),      # normalized x (bf16)
            pl.BlockSpec((c_tile, d), lambda i, j: (j, 0)),      # streamed W tile
            pl.BlockSpec((m_tile, 1), lambda i, j: (i, 0)),      # labels
        ],
        out_specs=(
            pl.BlockSpec((m_tile, c_tile), lambda i, j: (i, j)),
            pl.BlockSpec((m_tile, 1), lambda i, j: (i, 0)),
        ),
        scratch_shapes=[
            pltpu.VMEM((m_tile, _LANES), jnp.float32),   # lane-resident running max
            pltpu.VMEM((m_tile, _LANES), jnp.float32),   # lane-resident running sum(exp)
        ],
        compiler_params=pltpu.CompilerParams(
            dimension_semantics=("parallel", "arbitrary"),
            vmem_limit_bytes=budget),
    )(x_p, w_p, lab_p)

    logits = logits_p[:n, :c]
    # Target logit recovered in the wrapper (removes a per-step XLU reduce).
    tgt = jnp.take_along_axis(logits, labels.astype(jnp.int32)[:, None], axis=1)[:, 0]
    error = jnp.mean(lse_rows[:n, 0] - tgt)
    return error, logits


if __name__ == "__main__":
    # Small deterministic example consistent with forward(): x (N, D), labels (N,)
    N, D, C = 8, 32, 16          # batch, embedding_dim, n_classes
    SCALE, MARGIN = 30.0, 0.4

    key = jax.random.PRNGKey(0)
    kx, kw, kl = jax.random.split(key, 3)

    x = jax.random.normal(kx, (N, D), dtype=jnp.float32)
    weight = jax.random.normal(kw, (C, D), dtype=jnp.float32)
    labels = jax.random.randint(kl, (N,), 0, C, dtype=jnp.int32)

    # Mirror the module's label-range asserts (on concrete host values).
    assert int(jnp.min(labels)) >= 0
    assert int(jnp.max(labels)) < C

    error, logits = adm_softmax_loss(x, weight, labels, scale=SCALE, margin=MARGIN)
    jax.block_until_ready((error, logits))

    # Correctness check vs a pure-JAX reference matching the kernel's precision
    # choices (bf16 MXU operands, f32 accumulation).
    x_n = x * jax.lax.rsqrt(jnp.maximum(jnp.sum(x * x, axis=1, keepdims=True), 1e-24))
    cos = jnp.dot(x_n.astype(jnp.bfloat16), weight.astype(jnp.bfloat16).T,
                  preferred_element_type=jnp.float32)
    oh = jax.nn.one_hot(labels, C, dtype=jnp.float32)
    ref_logits = SCALE * jnp.where(oh == 1, cos - MARGIN, cos)
    ref_err = jnp.mean(
        jax.nn.logsumexp(ref_logits, axis=1)
        - jnp.take_along_axis(ref_logits, labels[:, None], axis=1)[:, 0])

    assert logits.shape == (N, C)
    assert jnp.allclose(logits, ref_logits, atol=1e-2, rtol=1e-3)
    assert jnp.allclose(error, ref_err, atol=1e-2, rtol=1e-3)

    print("KERNEL_OK")
</pallas_src>

<mosaic_0001>
module attributes {stable_mosaic.version = 11 : i64} {
  func.func @kernel(%arg0: i32, %arg1: i32, %arg2: memref<16x32xbf16, #tpu.memory_space<vmem>>, %arg3: memref<128x32xbf16, #tpu.memory_space<vmem>>, %arg4: memref<16x1xi32, #tpu.memory_space<vmem>>, %arg5: memref<16x128xf32, #tpu.memory_space<vmem>>, %arg6: memref<16x1xf32, #tpu.memory_space<vmem>>, %arg7: memref<16x128xf32, #tpu.memory_space<vmem>>, %arg8: memref<16x128xf32, #tpu.memory_space<vmem>>) attributes {dimension_semantics = [#tpu.dimension_semantics<parallel>, #tpu.dimension_semantics<arbitrary>], iteration_bounds = array<i64: 1, 1>, scalar_prefetch = 0 : i64, scratch_operands = 2 : i64, tpu.core_type = #tpu.core_type<tc>, window_params = [{transform_indices = @transform_0, window_bounds = array<i64: 16, 32>}, {transform_indices = @transform_1, window_bounds = array<i64: 128, 32>}, {transform_indices = @transform_2, window_bounds = array<i64: 16, 1>}, {transform_indices = @transform_3, window_bounds = array<i64: 16, 128>}, {transform_indices = @transform_4, window_bounds = array<i64: 16, 1>}]} {
    %c0_i32 = arith.constant 0 : i32
    %0 = arith.cmpi eq, %arg1, %c0_i32 : i32
    %1 = arith.extui %0 : i1 to i32
    %c0_i32_0 = arith.constant 0 : i32
    %2 = arith.cmpi ne, %1, %c0_i32_0 : i32
    scf.if %2 {
      %cst_22 = arith.constant -1.000000e+30 : f32
      %43 = vector.broadcast %cst_22 : f32 to vector<16x128xf32>
      %c0_23 = arith.constant 0 : index
      %c0_24 = arith.constant 0 : index
      %44 = vector.load %arg7[%c0_23, %c0_24] : memref<16x128xf32, #tpu.memory_space<vmem>>, vector<16x128xf32>
      tpu.vector_store %arg7[%c0_23, %c0_24], %43 {strides = array<i32>} : memref<16x128xf32, #tpu.memory_space<vmem>>, vector<16x128xf32>,
      %cst_25 = arith.constant 0.000000e+00 : f32
      %45 = vector.broadcast %cst_25 : f32 to vector<16x128xf32>
      %c0_26 = arith.constant 0 : index
      %c0_27 = arith.constant 0 : index
      %46 = vector.load %arg8[%c0_26, %c0_27] : memref<16x128xf32, #tpu.memory_space<vmem>>, vector<16x128xf32>
      tpu.vector_store %arg8[%c0_26, %c0_27], %45 {strides = array<i32>} : memref<16x128xf32, #tpu.memory_space<vmem>>, vector<16x128xf32>,
    } else {
    }
    %c0 = arith.constant 0 : index
    %c0_1 = arith.constant 0 : index
    %3 = vector.load %arg2[%c0, %c0_1] : memref<16x32xbf16, #tpu.memory_space<vmem>>, vector<16x32xbf16>
    %c0_2 = arith.constant 0 : index
    %c0_3 = arith.constant 0 : index
    %4 = vector.load %arg3[%c0_2, %c0_3] : memref<128x32xbf16, #tpu.memory_space<vmem>>, vector<128x32xbf16>
    %cst = arith.constant dense<0.000000e+00> : vector<16x128xf32>
    %5 = tpu.matmul %3, %4, %cst {dimension_numbers = #tpu.dot_dimension_numbers<[1], [1], [0], [0], [0, 0, 1, 0], [], []>} : vector<16x32xbf16>, vector<128x32xbf16>, vector<16x128xf32> -> vector<16x128xf32>
    %c128_i32 = arith.constant 128 : i32
    %6 = arith.muli %arg1, %c128_i32 : i32
    %7 = tpu.iota {dimensions = array<i32: 1>} : vector<16x128xi32>
    %8 = vector.broadcast %6 : i32 to vector<16x128xi32>
    %9 = arith.addi %8, %7 : vector<16x128xi32>
    %c0_4 = arith.constant 0 : index
    %c0_5 = arith.constant 0 : index
    %10 = vector.load %arg4[%c0_4, %c0_5] : memref<16x1xi32, #tpu.memory_space<vmem>>, vector<16x1xi32>
    %11 = vector.broadcast %10 : vector<16x1xi32> to vector<16x128xi32>
    %12 = arith.cmpi eq, %9, %11 : vector<16x128xi32>
    %cst_6 = arith.constant 4.000000e-01 : f32
    %13 = vector.broadcast %cst_6 : f32 to vector<16x128xf32>
    %14 = arith.subf %5, %13 : vector<16x128xf32>
    %15 = arith.select %12, %14, %5 : vector<16x128xi1>, vector<16x128xf32>
    %cst_7 = arith.constant 3.000000e+01 : f32
    %16 = vector.broadcast %cst_7 : f32 to vector<16x128xf32>
    %17 = arith.mulf %16, %15 : vector<16x128xf32>
    %c0_8 = arith.constant 0 : index
    %c0_9 = arith.constant 0 : index
    %18 = vector.load %arg5[%c0_8, %c0_9] : memref<16x128xf32, #tpu.memory_space<vmem>>, vector<16x128xf32>
    tpu.vector_store %arg5[%c0_8, %c0_9], %17 {strides = array<i32>} : memref<16x128xf32, #tpu.memory_space<vmem>>, vector<16x128xf32>,
    %c16_i32 = arith.constant 16 : i32
    %19 = vector.broadcast %c16_i32 : i32 to vector<16x128xi32>
    %20 = arith.cmpi slt, %9, %19 : vector<16x128xi32>
    %cst_10 = arith.constant -1.000000e+30 : f32
    %21 = vector.broadcast %cst_10 : f32 to vector<16x128xf32>
    %22 = arith.select %20, %17, %21 : vector<16x128xi1>, vector<16x128xf32>
    %c0_11 = arith.constant 0 : index
    %c0_12 = arith.constant 0 : index
    %23 = vector.load %arg7[%c0_11, %c0_12] : memref<16x128xf32, #tpu.memory_space<vmem>>, vector<16x128xf32>
    %24 = arith.maximumf %23, %22 : vector<16x128xf32>
    %cst_13 = arith.constant 0.000000e+00 : f32
    %25 = vector.broadcast %cst_13 : f32 to vector<16x128xf32>
    %26 = arith.subf %22, %24 : vector<16x128xf32>
    %27 = arith.truncf %26 : vector<16x128xf32> to vector<16x128xbf16>
    %28 = math.exp %27 : vector<16x128xbf16>
    %29 = arith.extf %28 : vector<16x128xbf16> to vector<16x128xf32>
    %30 = arith.addf %25, %29 : vector<16x128xf32>
    %31 = arith.subf %23, %24 : vector<16x128xf32>
    %32 = arith.truncf %31 : vector<16x128xf32> to vector<16x128xbf16>
    %33 = math.exp %32 : vector<16x128xbf16>
    %34 = arith.extf %33 : vector<16x128xbf16> to vector<16x128xf32>
    %c0_14 = arith.constant 0 : index
    %c0_15 = arith.constant 0 : index
    %35 = vector.load %arg8[%c0_14, %c0_15] : memref<16x128xf32, #tpu.memory_space<vmem>>, vector<16x128xf32>
    %36 = arith.mulf %34, %35 : vector<16x128xf32>
    %37 = arith.addf %36, %30 : vector<16x128xf32>
    %c0_16 = arith.constant 0 : index
    %c0_17 = arith.constant 0 : index
    %38 = vector.load %arg8[%c0_16, %c0_17] : memref<16x128xf32, #tpu.memory_space<vmem>>, vector<16x128xf32>
    tpu.vector_store %arg8[%c0_16, %c0_17], %37 {strides = array<i32>} : memref<16x128xf32, #tpu.memory_space<vmem>>, vector<16x128xf32>,
    %c0_18 = arith.constant 0 : index
    %c0_19 = arith.constant 0 : index
    %39 = vector.load %arg7[%c0_18, %c0_19] : memref<16x128xf32, #tpu.memory_space<vmem>>, vector<16x128xf32>
    tpu.vector_store %arg7[%c0_18, %c0_19], %24 {strides = array<i32>} : memref<16x128xf32, #tpu.memory_space<vmem>>, vector<16x128xf32>,
    %c0_i32_20 = arith.constant 0 : i32
    %40 = arith.cmpi eq, %arg1, %c0_i32_20 : i32
    %41 = arith.extui %40 : i1 to i32
    %c0_i32_21 = arith.constant 0 : i32
    %42 = arith.cmpi ne, %41, %c0_i32_21 : i32
    scf.if %42 {
      %c0_22 = arith.constant 0 : index
      %c0_23 = arith.constant 0 : index
      %43 = vector.load %arg7[%c0_22, %c0_23] : memref<16x128xf32, #tpu.memory_space<vmem>>, vector<16x128xf32>
      %cst_24 = arith.constant dense<0xFF800000> : vector<16xf32>
      %44 = vector.multi_reduction <maximumf>, %43, %cst_24 [1] : vector<16x128xf32> to vector<16xf32>
      %45 = vector.shape_cast %44 : vector<16xf32> to vector<16x1xf32>
      %c0_25 = arith.constant 0 : index
      %c0_26 = arith.constant 0 : index
      %46 = vector.load %arg8[%c0_25, %c0_26] : memref<16x128xf32, #tpu.memory_space<vmem>>, vector<16x128xf32>
      %47 = vector.broadcast %45 : vector<16x1xf32> to vector<16x128xf32>
      %48 = arith.subf %43, %47 : vector<16x128xf32>
      %49 = math.exp %48 : vector<16x128xf32>
      %50 = arith.mulf %46, %49 : vector<16x128xf32>
      %cst_27 = arith.constant dense<0.000000e+00> : vector<16xf32>
      %51 = vector.multi_reduction <add>, %50, %cst_27 [1] : vector<16x128xf32> to vector<16xf32>
      %52 = vector.shape_cast %51 : vector<16xf32> to vector<16x1xf32>
      %53 = math.log %52 : vector<16x1xf32>
      %54 = arith.addf %45, %53 : vector<16x1xf32>
      %c0_28 = arith.constant 0 : index
      %c0_29 = arith.constant 0 : index
      %55 = vector.load %arg6[%c0_28, %c0_29] : memref<16x1xf32, #tpu.memory_space<vmem>>, vector<16x1xf32>
      tpu.vector_store %arg6[%c0_28, %c0_29], %54 {strides = array<i32>} : memref<16x1xf32, #tpu.memory_space<vmem>>, vector<16x1xf32>,
    } else {
    }
    return
  }
  func.func @transform_0(%arg0: i32, %arg1: i32) -> (i32, i32) {
    %c0_i32 = arith.constant 0 : i32
    %c0_i32_0 = arith.constant 0 : i32
    return %arg0, %c0_i32 : i32, i32
  }
  func.func @transform_1(%arg0: i32, %arg1: i32) -> (i32, i32) {
    %c0_i32 = arith.constant 0 : i32
    %c0_i32_0 = arith.constant 0 : i32
    return %arg1, %c0_i32 : i32, i32
  }
  func.func @transform_2(%arg0: i32, %arg1: i32) -> (i32, i32) {
    %c0_i32 = arith.constant 0 : i32
    %c0_i32_0 = arith.constant 0 : i32
    return %arg0, %c0_i32 : i32, i32
  }
  func.func @transform_3(%arg0: i32, %arg1: i32) -> (i32, i32) {
    %c0_i32 = arith.constant 0 : i32
    return %arg0, %arg1 : i32, i32
  }
  func.func @transform_4(%arg0: i32, %arg1: i32) -> (i32, i32) {
    %c0_i32 = arith.constant 0 : i32
    %c0_i32_0 = arith.constant 0 : i32
    return %arg0, %c0_i32 : i32, i32
  }
}

</mosaic_0001>

<llo_original>
// kernel: adm_softmax_loss.1
$region0: #{adm_softmax_loss.1}
  #allocation0 [shape = 'u32[]', space=smem, size = 0x4, offset = 0x4, fixed_abs, tag = 'smem constant byte address 0x4 - core index']
  #allocation1 [shape = 'u32[144,128]{1,0:T(1,128)}', space=vmem, size = 0x12000, scoped, tag = 'internal scratch']
  #allocation2 [shape = 'f32[16,128]{1,0:T(8,128)}', space=vmem, size = 0x2000, scoped, tag = 'scratch operand']
  #allocation3 [shape = 'f32[16,128]{1,0:T(8,128)}', space=vmem, size = 0x2000, scoped, tag = 'scratch operand']
  %s0 = inlined_call_operand.hbm [shape: bf16[16,32], index: 0, kind: input, shape index: {}]
  %s1 = inlined_call_operand.hbm [shape: bf16[128,32], index: 1, kind: input, shape index: {}]
  %s2 = inlined_call_operand.hbm [shape: s32[16,1], index: 2, kind: input, shape index: {}]
  %s3 = inlined_call_operand.hbm [shape: f32[16,128], index: 3, kind: output, shape index: {0}]
  %s4 = inlined_call_operand.hbm [shape: f32[16,1], index: 4, kind: output, shape index: {1}]
  %5 = xla_tuple %s3, %s4
  %s6 = sld [smem:[#allocation0]]
  $region50: #{adm_softmax_loss.1} parent=0
    _
  %s8 = ssub.s32 1, %s6
  %s9 = scalar_select 0, %s8, %s6
  $region1: #{adm_softmax_loss.1} parent=0
    #allocation4 [shape = 'u8[4096]{0}', space=vmem, size = 0x1000, scoped, tag = 'input window, operand 0, single buffered']
    #allocation5 [shape = 's32[1]{0}', space=sflag, size = 0x4, scoped, tag = 'scoped memory for adm_softmax_loss.1']
    #allocation6 [shape = 's32[1]{0}', space=sflag, size = 0x4, scoped, tag = 'scoped memory for adm_softmax_loss.1']
    #allocation7 [shape = 'u8[32768]{0}', space=vmem, size = 0x8000, scoped, tag = 'input window, operand 1, single buffered']
    #allocation8 [shape = 's32[1]{0}', space=sflag, size = 0x4, scoped, tag = 'scoped memory for adm_softmax_loss.1']
    #allocation9 [shape = 'u8[8192]{0}', space=vmem, size = 0x2000, scoped, tag = 'input window, operand 2, single buffered']
    #allocation10 [shape = 'u8[8192]{0}', space=vmem, size = 0x2000, scoped, tag = 'output window, operand 0, single buffered']
    #allocation11 [shape = 'u8[8192]{0}', space=vmem, size = 0x2000, scoped, tag = 'output window, operand 1, single buffered']
    #allocation12 [shape = 's32[1]{0}', space=sflag, size = 0x4, scoped, tag = 'scoped memory for adm_softmax_loss.1']
    %10 = vsyncpa [#allocation5], 0
    %11 = vsyncpa [#allocation8], 0
    %12 = vsyncpa [#allocation6], 0
    %13 = vsyncpa [#allocation12], 0
    // Predicated region
    $region2: #{adm_softmax_loss.1} parent=1 // pred_check
      _
    $region3: #{adm_softmax_loss.1} parent=1 // pred_check_branch
      %15 = sbr.rel (0) target = $region5
    $region4: #{adm_softmax_loss.1} parent=1 // pred_region
      %s17 = ssub.s32 128, 128
      %18 = vsyncadd [#allocation5], %s17
      %s19 = sshll.u32 [#allocation4], 4
      %s20 = int_to_ptr.vmem [resolvable:$true] %s19
      %25 = dma.hbm_to_vmem [thread:$0]  %s0, 128, %s20, [#allocation5], 64, 64, 4
    $region5: #{adm_softmax_loss.1} parent=1 // pred_fallthru
      _
    // Predicated region
    $region6: #{adm_softmax_loss.1} parent=1 // pred_check
      _
    $region7: #{adm_softmax_loss.1} parent=1 // pred_check_branch
      %27 = sbr.rel (0) target = $region9
    $region8: #{adm_softmax_loss.1} parent=1 // pred_region
      %s29 = ssub.s32 1024, 1024
      %30 = vsyncadd [#allocation8], %s29
      %s31 = sshll.u32 [#allocation7], 4
      %s32 = int_to_ptr.vmem [resolvable:$true] %s31
      %37 = dma.hbm_to_vmem [thread:$0]  %s1, 1024, %s32, [#allocation8], 64, 64, 4
    $region9: #{adm_softmax_loss.1} parent=1 // pred_fallthru
      _
    // Predicated region
    $region10: #{adm_softmax_loss.1} parent=1 // pred_check
      _
    $region11: #{adm_softmax_loss.1} parent=1 // pred_check_branch
      %39 = sbr.rel (0) target = $region13
    $region12: #{adm_softmax_loss.1} parent=1 // pred_region
      %s41 = ssub.s32 256, 256
      %42 = vsyncadd [#allocation8], %s41
      %s43 = sshll.u32 [#allocation9], 4
      %s44 = int_to_ptr.vmem [resolvable:$true] %s43
      %49 = dma.hbm_to_vmem [thread:$0]  %s2, 256, %s44, [#allocation8], 128, 128, 8
    $region13: #{adm_softmax_loss.1} parent=1 // pred_fallthru
      _
    // Predicated region
    $region14: #{adm_softmax_loss.1} parent=1 // pred_check
      _
    $region15: #{adm_softmax_loss.1} parent=1 // pred_check_branch
      %51 = sbr.rel (0) target = $region17
    $region16: #{adm_softmax_loss.1} parent=1 // pred_region
      %52 = dma.done [#allocation5], 128
    $region17: #{adm_softmax_loss.1} parent=1 // pred_fallthru
      _
    // Predicated region
    $region18: #{adm_softmax_loss.1} parent=1 // pred_check
      _
    $region19: #{adm_softmax_loss.1} parent=1 // pred_check_branch
      %54 = sbr.rel (0) target = $region21
    $region20: #{adm_softmax_loss.1} parent=1 // pred_region
      %55 = dma.done [#allocation8], 1024
    $region21: #{adm_softmax_loss.1} parent=1 // pred_fallthru
      _
    // Predicated region
    $region22: #{adm_softmax_loss.1} parent=1 // pred_check
      _
    $region23: #{adm_softmax_loss.1} parent=1 // pred_check_branch
      %57 = sbr.rel (0) target = $region25
    $region24: #{adm_softmax_loss.1} parent=1 // pred_region
      %58 = dma.done [#allocation8], 256
    $region25: #{adm_softmax_loss.1} parent=1 // pred_fallthru
      _
    %p60 = scmp.eq.s32.totalorder 0, 0
    // Predicated region
    $region26: #{adm_softmax_loss.1} parent=1 // pred_check
      %p61 = pneg %p60
    $region27: #{adm_softmax_loss.1} parent=1 // pred_check_branch
      %63 = sbr.rel (%p61) target = $region29
    $region28: #{adm_softmax_loss.1} parent=1 // pred_region
      %64 = vst [vmem:[#allocation2] sm:$0xff] -1e+30
      %65 = vst [vmem:[#allocation2 + $0x8] sm:$0xff] -1e+30
      %66 = vst [vmem:[#allocation3] sm:$0xff] 0.0
      %67 = vst [vmem:[#allocation3 + $0x8] sm:$0xff] 0.0
    $region29: #{adm_softmax_loss.1} parent=1 // pred_fallthru
      _
    %v68 = vld [vmem:[#allocation4] sm:$0xf]
    %v69 = vld [vmem:[#allocation4 + $0x4] sm:$0xf]
    %v70 = vld [vmem:[#allocation7] sm:$0xf]
    %v71 = vld [vmem:[#allocation7 + $0x4] sm:$0xf]
    %v72 = vld [vmem:[#allocation7 + $0x8] sm:$0xf]
    %v73 = vld [vmem:[#allocation7 + $0xc] sm:$0xf]
    %v74 = vld [vmem:[#allocation7 + $0x10] sm:$0xf]
    %v75 = vld [vmem:[#allocation7 + $0x14] sm:$0xf]
    %v76 = vld [vmem:[#allocation7 + $0x18] sm:$0xf]
    %v77 = vld [vmem:[#allocation7 + $0x1c] sm:$0xf]
    %v78 = vld [vmem:[#allocation7 + $0x20] sm:$0xf]
    %v79 = vld [vmem:[#allocation7 + $0x24] sm:$0xf]
    %v80 = vld [vmem:[#allocation7 + $0x28] sm:$0xf]
    %v81 = vld [vmem:[#allocation7 + $0x2c] sm:$0xf]
    %v82 = vld [vmem:[#allocation7 + $0x30] sm:$0xf]
    %v83 = vld [vmem:[#allocation7 + $0x34] sm:$0xf]
    %v84 = vld [vmem:[#allocation7 + $0x38] sm:$0xf]
    %v85 = vld [vmem:[#allocation7 + $0x3c] sm:$0xf]
    %v88 = vunpack.c.l.b16 %v68
    %v89 = vunpack.c.l.b16 %v69
    %v90 = vpack.c.b16 %v89, %v88
    %v107 = vunpack.c.l.b16 %v70
    %v108 = vunpack.c.l.b16 %v71
    %v109 = vunpack.c.l.b16 %v72
    %v110 = vunpack.c.l.b16 %v73
    %v111 = vunpack.c.l.b16 %v74
    %v112 = vunpack.c.l.b16 %v75
    %v113 = vunpack.c.l.b16 %v76
    %v114 = vunpack.c.l.b16 %v77
    %v115 = vunpack.c.l.b16 %v78
    %v116 = vunpack.c.l.b16 %v79
    %v117 = vunpack.c.l.b16 %v80
    %v118 = vunpack.c.l.b16 %v81
    %v119 = vunpack.c.l.b16 %v82
    %v120 = vunpack.c.l.b16 %v83
    %v121 = vunpack.c.l.b16 %v84
    %v122 = vunpack.c.l.b16 %v85
    %v123 = vpack.c.b16 %v108, %v107
    %v124 = vpack.c.b16 %v110, %v109
    %v125 = vpack.c.b16 %v112, %v111
    %v126 = vpack.c.b16 %v114, %v113
    %v127 = vpack.c.b16 %v116, %v115
    %v128 = vpack.c.b16 %v118, %v117
    %v129 = vpack.c.b16 %v120, %v119
    %v130 = vpack.c.b16 %v122, %v121
    %vm131 = vcmask 261120
    %v133 = vsel %vm131, %v90, 0
    %v136 = vsel %vm131, %v123, 0
    %v139 = vsel %vm131, %v124, 0
    %v142 = vsel %vm131, %v125, 0
    %v145 = vsel %vm131, %v126, 0
    %v148 = vsel %vm131, %v127, 0
    %v151 = vsel %vm131, %v128, 0
    %v154 = vsel %vm131, %v129, 0
    %v157 = vsel %vm131, %v130, 0
    %159 = vmatprep.subr.bf16.mxu0 0
    %160 = vmatpush1.bf16.xpose.msra.mxu0 %v136
    %161 = vmatprep.subr.bf16.mxu0 0
    %162 = vmatpush1.bf16.xpose.msra.mxu0 %v139
    %163 = vmatprep.subr.bf16.mxu0 0
    %164 = vmatpush1.bf16.xpose.msra.mxu0 %v142
    %165 = vmatprep.subr.bf16.mxu0 0
    %166 = vmatpush1.bf16.xpose.msra.mxu0 %v145
    %167 = vmatprep.subr.bf16.mxu0 0
    %168 = vmatpush1.bf16.xpose.msra.mxu0 %v148
    %169 = vmatprep.subr.bf16.mxu0 0
    %170 = vmatpush1.bf16.xpose.msra.mxu0 %v151
    %171 = vmatprep.subr.bf16.mxu0 0
    %172 = vmatpush1.bf16.xpose.msra.mxu0 %v154
    %173 = vmatprep.subr.bf16.mxu0 0
    %174 = vmatpush1.bf16.xpose.msra.mxu0 %v157
    %175 = vmatprep.subr.bf16.mxu0 0
    %176 = vmatpush1.bf16.xpose.msra.mxu0 0
    %177 = vmatprep.subr.bf16.mxu0 0
    %178 = vmatpush1.bf16.xpose.msra.mxu0 0
    %179 = vmatprep.subr.bf16.mxu0 0
    %180 = vmatpush1.bf16.xpose.msra.mxu0 0
    %181 = vmatprep.subr.bf16.mxu0 0
    %182 = vmatpush1.bf16.xpose.msra.mxu0 0
    %183 = vmatprep.subr.bf16.mxu0 0
    %184 = vmatpush1.bf16.xpose.msra.mxu0 0
    %185 = vmatprep.subr.bf16.mxu0 0
    %186 = vmatpush1.bf16.xpose.msra.mxu0 0
    %187 = vmatprep.subr.bf16.mxu0 0
    %188 = vmatpush1.bf16.xpose.msra.mxu0 0
    %189 = vmatprep.subr.bf16.mxu0 0
    %190 = vmatpush1.bf16.xpose.msra.mxu0 0
    %191 = vmatprep.mubr.bf16.mxu0 0
    %192 = vmatmul.mubr.bf16.gmra.mrb[0].mxu0 %v133
    %v193 = vpop.f32.mrb[0].mxu0
    %v194 = vadd.f32 0.0, %v193
    %v195 = vpop.f32.mrb[0].mxu0
    %v196 = vpop.f32.mrb[0].mxu0
    %v197 = vadd.f32 0.0, %v196
    %v198 = vpop.f32.mrb[0].mxu0
    %199 = vdwg.mxu0
    %s200 = smul.u32 0, 128
    %v201 = vlaneseq
    %v202 = vand.u32 %v201, 127
    %v203 = vstv %s200
    %v204 = vadd.s32 %v203, %v202
    %v205 = vld [vmem:[#allocation9] sm:$0xff]
    %v206 = vld [vmem:[#allocation9 + $0x8] sm:$0xff]
    %207 = vset.pattern.permute.xlu0 0
    %208 = vperm.xlu0 %207, %v205
    %v209 = vpop.permute.xlu0 %208
    %210 = vset.pattern.permute.xlu0 0
    %211 = vperm.xlu0 %210, %v206
    %v212 = vpop.permute.xlu0 %211
    %vm213 = vcmp.eq.s32.totalorder %v204, %v209
    %vm214 = vcmp.eq.s32.totalorder %v204, %v212
    %v215 = vsub.f32 %v194, 0.4
    %v216 = vsub.f32 %v197, 0.4
    %v217 = vsel %vm213, %v215, %v194
    %v218 = vsel %vm214, %v216, %v197
    %v219 = vmul.f32 %v217, 30.0
    %v220 = vmul.f32 %v218, 30.0
    %221 = vst [vmem:[#allocation10] sm:$0xff] %v219
    %222 = vst [vmem:[#allocation10 + $0x8] sm:$0xff] %v220
    %vm223 = vcmp.lt.s32.totalorder %v204, 16
    %v224 = vsel %vm223, %v219, -1e+30
    %v225 = vsel %vm223, %v220, -1e+30
    %v226 = vld [vmem:[#allocation2] sm:$0xff]
    %v227 = vld [vmem:[#allocation2 + $0x8] sm:$0xff]
    %v228 = vmax.f32 %v226, %v224
    %v229 = vmax.f32 %v227, %v225
    %v230 = vsub.f32 %v224, %v228
    %v231 = vsub.f32 %v225, %v229
    %v232 = vpack.c.bf16 %v231, %v230
    %v234 = vmul.bf16 %v232, 1069105081
    %v235 = vpow.bf16.pop %v234
    %v236 = vunpack.c.l.bf16 %v235
    %v237 = vunpack.c.h.bf16 %v235
    %v238 = vadd.f32 %v236, 0.0
    %v239 = vadd.f32 %v237, 0.0
    %v240 = vsub.f32 %v226, %v228
    %v241 = vsub.f32 %v227, %v229
    %v242 = vpack.c.bf16 %v241, %v240
    %v244 = vmul.bf16 %v242, 1069105081
    %v245 = vpow.bf16.pop %v244
    %v246 = vunpack.c.l.bf16 %v245
    %v247 = vunpack.c.h.bf16 %v245
    %v248 = vld [vmem:[#allocation3] sm:$0xff]
    %v249 = vld [vmem:[#allocation3 + $0x8] sm:$0xff]
    %v250 = vmul.f32 %v246, %v248
    %v251 = vmul.f32 %v247, %v249
    %v252 = vadd.f32 %v250, %v238
    %v253 = vadd.f32 %v251, %v239
    %254 = vst [vmem:[#allocation3] sm:$0xff] %v252
    %255 = vst [vmem:[#allocation3 + $0x8] sm:$0xff] %v253
    %256 = vst [vmem:[#allocation2] sm:$0xff] %v228
    %257 = vst [vmem:[#allocation2 + $0x8] sm:$0xff] %v229
    // Predicated region
    $region30: #{adm_softmax_loss.1} parent=1 // pred_check
      %p258 = pneg %p60
    $region31: #{adm_softmax_loss.1} parent=1 // pred_check_branch
      %260 = sbr.rel (%p258) target = $region33
    $region32: #{adm_softmax_loss.1} parent=1 // pred_region
      %v261 = vld [vmem:[#allocation2] sm:$0xff]
      %v262 = vld [vmem:[#allocation2 + $0x8] sm:$0xff]
      %263 = vmax.xlane.f32.xlu0 %v261
      %v264 = vpop.xlane.xlu0 %263
      %265 = vmax.xlane.f32.xlu0 %v262
      %v266 = vpop.xlane.xlu0 %265
      %v267 = vld [vmem:[#allocation3] sm:$0xff]
      %v268 = vld [vmem:[#allocation3 + $0x8] sm:$0xff]
      %v269 = vsub.f32 %v261, %v264
      %v270 = vsub.f32 %v262, %v266
      %v271 = vmul.f32 %v269, 1.442695
      %v272 = vpow.pop %v271
      %v273 = vmul.f32 %v270, 1.442695
      %v274 = vpow.pop %v273
      %v275 = vmul.f32 %v267, %v272
      %v276 = vmul.f32 %v268, %v274
      %277 = vadd.xlane.f32.xlu0 %v275
      %v278 = vpop.xlane.xlu0 %277
      %279 = vadd.xlane.f32.xlu0 %v276
      %v280 = vpop.xlane.xlu0 %279
      %v281 = vlog2.pop %v278
      %v282 = vmul.f32 %v281, 0.6931472
      %v283 = vlog2.pop %v280
      %v284 = vmul.f32 %v283, 0.6931472
      %v285 = vadd.f32 %v264, %v282
      %v286 = vadd.f32 %v266, %v284
      %vm287 = vcmask 7168
      %288 = vst.msk [vmem:[#allocation11] sm:$0xff] %vm287, %v285
      %289 = vst.msk [vmem:[#allocation11 + $0x8] sm:$0xff] %vm287, %v286
    $region33: #{adm_softmax_loss.1} parent=1 // pred_fallthru
      _
    // Predicated region
    $region34: #{adm_softmax_loss.1} parent=1 // pred_check
      _
    $region35: #{adm_softmax_loss.1} parent=1 // pred_check_branch
      %291 = sbr.rel (0) target = $region37
    $region36: #{adm_softmax_loss.1} parent=1 // pred_region
      %s293 = ssub.s32 256, 256
      %294 = vsyncadd [#allocation6], %s293
      %s295 = sshll.u32 [#allocation10], 4
      %s296 = int_to_ptr.vmem [resolvable:$true] %s295
      %301 = dma.vmem_to_hbm [thread:$0]  %s296, 256, %s3, [#allocation6], 128, 128, 8
    $region37: #{adm_softmax_loss.1} parent=1 // pred_fallthru
      _
    // Predicated region
    $region38: #{adm_softmax_loss.1} parent=1 // pred_check
      _
    $region39: #{adm_softmax_loss.1} parent=1 // pred_check_branch
      %303 = sbr.rel (0) target = $region41
    $region40: #{adm_softmax_loss.1} parent=1 // pred_region
      %s305 = ssub.s32 256, 256
      %306 = vsyncadd [#allocation12], %s305
      %s307 = sshll.u32 [#allocation11], 4
      %s308 = int_to_ptr.vmem [resolvable:$true] %s307
      %313 = dma.vmem_to_hbm [thread:$0]  %s308, 256, %s4, [#allocation12], 128, 128, 8
    $region41: #{adm_softmax_loss.1} parent=1 // pred_fallthru
      _
    // Predicated region
    $region42: #{adm_softmax_loss.1} parent=1 // pred_check
      _
    $region43: #{adm_softmax_loss.1} parent=1 // pred_check_branch
      %315 = sbr.rel (0) target = $region45
    $region44: #{adm_softmax_loss.1} parent=1 // pred_region
      %316 = dma.done [#allocation6], 256
    $region45: #{adm_softmax_loss.1} parent=1 // pred_fallthru
      _
    // Predicated region
    $region46: #{adm_softmax_loss.1} parent=1 // pred_check
      _
    $region47: #{adm_softmax_loss.1} parent=1 // pred_check_branch
      %318 = sbr.rel (0) target = $region49
    $region48: #{adm_softmax_loss.1} parent=1 // pred_region
      %319 = dma.done [#allocation12], 256
    $region49: #{adm_softmax_loss.1} parent=1 // pred_fallthru
      _
    %320 = vsyncpa [#allocation5], 1
    %321 = vsyncpa [#allocation8], 1
    %322 = vsyncpa [#allocation6], 1
    %323 = vsyncpa [#allocation12], 1

</llo_original>
